<compile_context>
chip_gen: v5e
topology: v5e:2x2
jax: 0.10.0
libtpu: 0.0.40
codegen_flags: <defaults>
</compile_context>

<pallas_src>
import functools

import jax
import jax.numpy as jnp
from jax.experimental import pallas as pl
from jax.experimental.pallas import tpu as pltpu


def _gene_pos_emb_dma_kernel(rows_per_shard, chunks, table_ref, out_ref, sems):
    """Copy this shard's row range of `table` into `out` with concurrent DMAs.

    rows_per_shard: static int, rows handled by one grid program.
    chunks:         static tuple of (offset_within_shard, size) pairs.
    table_ref/out_ref: full HBM refs (memory_space=pl.ANY).
    sems:           DMA semaphore array of length len(chunks).
    """
    pid = pl.program_id(0)
    row0 = pid * rows_per_shard
    if rows_per_shard % 8 == 0:
        # Sublane-aligned shard start -> keep the DMA on the fast contiguous path.
        row0 = pl.multiple_of(row0, 8)

    copies = []
    for c, (off, size) in enumerate(chunks):
        start = row0 + off
        cp = pltpu.make_async_copy(
            table_ref.at[pl.ds(start, size), :],
            out_ref.at[pl.ds(start, size), :],
            sems.at[c],
        )
        cp.start()          # issue all DMAs first (multiple outstanding copies)
        copies.append(cp)
    for cp in copies:       # then wait for all of them
        cp.wait()


def gene_positional_embedding(table, T, *, num_chunks=4,
                              min_pallas_bytes=1 << 20, force_pallas=False):
    """Pallas equivalent of GenePositionalEmbedding.forward(T).

    Args:
      table: (n_genes, emb_dim) embedding weight, same layout as nn.Embedding.
      T:     static int, number of leading rows to gather (indices arange(T)).
      num_chunks: max concurrent DMAs per shard on the Pallas path.
      min_pallas_bytes: below this size the wrapper returns a plain static
        slice (fusable by XLA) instead of launching the Pallas kernel.
      force_pallas: force the Pallas DMA path (used for testing).
    Returns:
      (T, emb_dim) array, dtype == table.dtype.
    """
    n_genes, emb_dim = table.shape
    T = int(T)
    assert 0 < T <= n_genes
    dtype_bytes = jnp.dtype(table.dtype).itemsize
    nbytes = T * emb_dim * dtype_bytes

    # Fast path: a 0-FLOP static slice that XLA can fuse into the consumer.
    if not force_pallas and nbytes < min_pallas_bytes:
        return jax.lax.slice(table, (0, 0), (T, emb_dim))

    # --- Pallas standalone-copy path ---------------------------------------
    # Shard rows across grid programs; "parallel" lets v7x use both TCs.
    num_shards = 2 if (T % 2 == 0 and T >= 16) else 1
    rows_per_shard = T // num_shards

    # Static per-shard chunk plan: k concurrent DMAs, each >= 8 rows when possible.
    k = max(1, min(int(num_chunks), rows_per_shard // 8))
    base, rem = divmod(rows_per_shard, k)
    chunks, off = [], 0
    for c in range(k):
        sz = base + (1 if c < rem else 0)
        chunks.append((off, sz))
        off += sz
    assert off == rows_per_shard

    kernel = functools.partial(_gene_pos_emb_dma_kernel,
                               rows_per_shard, tuple(chunks))
    return pl.pallas_call(
        kernel,
        out_shape=jax.ShapeDtypeStruct((T, emb_dim), table.dtype),
        grid=(num_shards,),
        # Leave both operands in HBM; the kernel DMAs directly between them
        # (no VMEM staging, no BlockSpec pipeline).
        in_specs=[pl.BlockSpec(memory_space=pl.ANY)],
        out_specs=pl.BlockSpec(memory_space=pl.ANY),
        scratch_shapes=[pltpu.SemaphoreType.DMA((k,))],
        compiler_params=pltpu.CompilerParams(
            dimension_semantics=("parallel",)),
        cost_estimate=pl.CostEstimate(
            flops=0,
            transcendentals=0,
            bytes_accessed=2 * T * emb_dim * dtype_bytes,
        ),
    )(table)


if __name__ == "__main__":
    key = jax.random.PRNGKey(0)

    # --- Case 1: small module-sized shapes (nn.Embedding default init N(0,1)).
    n_genes, emb_dim = 16, 32
    k1, k2 = jax.random.split(key)
    table = jax.random.normal(k1, (n_genes, emb_dim), dtype=jnp.float32)
    T = 8

    # Default wrapper path (small -> plain fused slice).
    out_slice = jax.block_until_ready(gene_positional_embedding(table, T))
    ref = jnp.take(table, jnp.arange(T), axis=0)
    assert out_slice.shape == (T, emb_dim) and out_slice.dtype == table.dtype
    assert jnp.allclose(out_slice, ref), "slice-path mismatch vs reference gather"

    # Forced Pallas DMA path on the same inputs.
    out_pallas = jax.block_until_ready(
        gene_positional_embedding(table, T, force_pallas=True))
    assert jnp.allclose(out_pallas, ref), "pallas-path mismatch vs reference gather"

    # --- Case 2: larger table exercising multi-shard + multi-DMA plan.
    n_genes2, emb_dim2 = 512, 128
    table2 = jax.random.normal(k2, (n_genes2, emb_dim2), dtype=jnp.float32)
    for T2 in (384, 100):   # divisible and ragged row counts
        out2 = jax.block_until_ready(
            gene_positional_embedding(table2, T2, force_pallas=True))
        ref2 = jnp.take(table2, jnp.arange(T2), axis=0)
        assert out2.shape == (T2, emb_dim2) and out2.dtype == table2.dtype
        assert jnp.allclose(out2, ref2), f"pallas-path mismatch at T={T2}"

    print("KERNEL_OK")
</pallas_src>

<mosaic_0001>
module attributes {stable_mosaic.version = 11 : i64} {
  func.func @_gene_pos_emb_dma_kernel(%arg0: i32, %arg1: memref<16x32xf32, #tpu.memory_space<any>>, %arg2: memref<8x32xf32, #tpu.memory_space<any>>, %arg3: memref<1x!tpu.dma_semaphore, #tpu.memory_space<semaphore_mem>>) attributes {dimension_semantics = [#tpu.dimension_semantics<parallel>], iteration_bounds = array<i64: 1>, scalar_prefetch = 0 : i64, scratch_operands = 1 : i64, tpu.core_type = #tpu.core_type<tc>, window_params = [{}, {}]} {
    %c8_i32 = arith.constant 8 : i32
    %0 = arith.muli %arg0, %c8_i32 : i32
    %1 = tpu.assume_multiple %0, 8 : i32
    %c0_i32 = arith.constant 0 : i32
    %2 = arith.addi %1, %c0_i32 : i32
    %c0_i32_0 = arith.constant 0 : i32
    %c0_i32_1 = arith.constant 0 : i32
    %3 = tpu.memref_slice %arg1[%2, %c0_i32_1] : memref<16x32xf32, #tpu.memory_space<any>> -> memref<8x32xf32, #tpu.memory_space<any>>
    %c0_i32_2 = arith.constant 0 : i32
    %4 = tpu.memref_slice %arg2[%2, %c0_i32_2] : memref<8x32xf32, #tpu.memory_space<any>> -> memref<8x32xf32, #tpu.memory_space<any>>
    %5 = tpu.memref_slice %arg3[%c0_i32_0] : memref<1x!tpu.dma_semaphore, #tpu.memory_space<semaphore_mem>> -> memref<1x!tpu.dma_semaphore, #tpu.memory_space<semaphore_mem>>
    %6 = tpu.memref_squeeze %5 : memref<1x!tpu.dma_semaphore, #tpu.memory_space<semaphore_mem>> -> memref<!tpu.dma_semaphore, #tpu.memory_space<semaphore_mem>>
    tpu.enqueue_dma source(%3 : memref<8x32xf32, #tpu.memory_space<any>>) target(%4 : memref<8x32xf32, #tpu.memory_space<any>>) target_semaphore(%6 : memref<!tpu.dma_semaphore, #tpu.memory_space<semaphore_mem>>)
    %c0_i32_3 = arith.constant 0 : i32
    %c0_i32_4 = arith.constant 0 : i32
    %7 = tpu.memref_slice %arg1[%2, %c0_i32_4] : memref<16x32xf32, #tpu.memory_space<any>> -> memref<8x32xf32, #tpu.memory_space<any>>
    %c0_i32_5 = arith.constant 0 : i32
    %8 = tpu.memref_slice %arg2[%2, %c0_i32_5] : memref<8x32xf32, #tpu.memory_space<any>> -> memref<8x32xf32, #tpu.memory_space<any>>
    %9 = tpu.memref_slice %arg3[%c0_i32_3] : memref<1x!tpu.dma_semaphore, #tpu.memory_space<semaphore_mem>> -> memref<1x!tpu.dma_semaphore, #tpu.memory_space<semaphore_mem>>
    %10 = tpu.memref_squeeze %9 : memref<1x!tpu.dma_semaphore, #tpu.memory_space<semaphore_mem>> -> memref<!tpu.dma_semaphore, #tpu.memory_space<semaphore_mem>>
    tpu.wait_dma2 semaphore(%10 : memref<!tpu.dma_semaphore, #tpu.memory_space<semaphore_mem>>) src(%7 : memref<8x32xf32, #tpu.memory_space<any>>) dst(%8 : memref<8x32xf32, #tpu.memory_space<any>>)
    return
  }
}

</mosaic_0001>

<llo_original>
// kernel: tpu_custom_call.1
$region0: #{tpu_custom_call.1}
  #allocation0 [shape = 'u32[]', space=smem, size = 0x4, offset = 0x4, fixed_abs, tag = 'smem constant byte address 0x4 - core index']
  #allocation1 [shape = 'u32[72,128]{1,0:T(1,128)}', space=vmem, size = 0x9000, scoped, tag = 'internal scratch']
  #allocation2 [shape = 's32[1]{0}', space=sflag, size = 0x4, scoped, tag = 'scratch operand']
  #allocation3 [shape = 's32[]', space=sflag, size = 0x4, offset = 0, fixed_abs, tag = 'sflag constant byte address 0x0 - dummy sync flag']
  #allocation4 [shape = 'u32[0]{0}', space=smem, size = 0, offset = 0, fixed_abs, tag = 'smem constant byte address 0x0 - null']
  %s0 = inlined_call_operand.hbm [shape: f32[16,32], index: 0, kind: input, shape index: {}]
  %s1 = inlined_call_operand.hbm [shape: f32[8,32], index: 1, kind: output, shape index: {}]
  %s2 = sld [smem:[#allocation0]]
  $region2: #{tpu_custom_call.1} parent=0
    _
  %s4 = ssub.s32 1, %s2
  %s5 = scalar_select 0, %s4, %s2
  %s6 = smul.u32 0, 8
  %s7 = scalar_lea.hbm %s0, %s6
  %s8 = scalar_lea.hbm %s1, %s6
  %s10 = sshll.u32 1, 14
  %s11 = sxor.u32 4294967295, %s10
  %s13 = sshll.u32 %s7, 4
  %s14 = int_to_ptr.hbm [resolvable:$true] %s13
  %s15 = sshll.u32 %s8, 4
  %s16 = int_to_ptr.hbm [resolvable:$true] %s15
  %19 = dma.general %s14, 128, %s16, [#allocation2], [#allocation3], [#allocation4], 0, 0
  %s20 = smul.u32 8, 1
  %s21 = sshll.u32 %s20, 4
  %22 = dma.done [#allocation2], %s21
  %23 = vsyncmov [#allocation2]
  %s24 = vpop.sfrf %23
  %p25 = scmp.eq.s32.totalorder %s24, 0
  %p26 = pneg %p25
  %28 = shalt.err (%p26)

</llo_original>
